<compile_context>
chip_gen: v5e
topology: v5e:2x2
jax: 0.10.0
libtpu: 0.0.40
codegen_flags: <defaults>
</compile_context>

<pallas_src>
import functools

import jax
import jax.numpy as jnp
from jax.experimental import pallas as pl
from jax.experimental.pallas import tpu as pltpu

BN_EPS = 1e-5


# ---------------------------------------------------------------------------
# Pass 1: conv (kh shifted matmuls vs banded tap weights) + bias
#         + per-sample partial BN statistics (sum, sum-of-squares).
# ---------------------------------------------------------------------------
def _conv_stats_kernel(x_ref, w_ref, b_ref, conv_ref, stats_ref, *, kh, stride, group):
    # x_ref:     [G, Hp, Wp*Cin]       padded input slabs for G samples
    # w_ref:     [kh, Wp*Cin, Wo*Cout] banded tap weights (grid-resident)
    # b_ref:     [1, Wo*Cout]          conv bias tiled per lane (f32)
    # conv_ref:  [G, Ho, Wo*Cout]      f32 pre-BN value y = conv + bias
    # stats_ref: [G, 2, Wo*Cout]       row 0: sum_h(y), row 1: sum_h(y*y)
    ho = conv_ref.shape[1]
    bias_row = b_ref[...]                                 # hoisted: one load
    for s in range(group):                                # G is small & static
        x = x_ref[s]                                      # [Hp, Wp*Cin]
        acc = jnp.zeros(conv_ref.shape[1:], dtype=jnp.float32)
        for i in range(kh):                               # kh is tiny & static (3)
            if stride == 1:
                xs = x[i:i + ho, :]
            else:
                xs = x[i:i + stride * (ho - 1) + 1:stride, :]
            acc = acc + jnp.dot(xs, w_ref[i], preferred_element_type=jnp.float32)
        acc = acc + bias_row                              # + conv bias (broadcast)
        conv_ref[s] = acc.astype(conv_ref.dtype)
        s1 = jnp.sum(acc, axis=0, keepdims=True)          # single streaming pass:
        s2 = jnp.sum(acc * acc, axis=0, keepdims=True)    # sum and sum-of-squares
        stats_ref[s] = jnp.concatenate([s1, s2], axis=0)


# ---------------------------------------------------------------------------
# Pass 2: y * scale + shift  (precombined BN affine)  ->  ReLU, in place.
# Works on the row-flattened [N*Ho, Wo*Cout] slab: one big lane-dense FMA tile.
# ---------------------------------------------------------------------------
def _bn_relu_kernel(conv_ref, scale_ref, shift_ref, o_ref):
    y = conv_ref[...] * scale_ref[...] + shift_ref[...]
    o_ref[...] = jnp.maximum(y, 0.0).astype(o_ref.dtype)


def _pick_samples_per_step(n, per_sample_bytes, budget_bytes=4 << 20):
    """Largest divisor of n whose block stays under the VMEM budget (>=1)."""
    for g in range(n, 0, -1):
        if n % g == 0 and g * per_sample_bytes <= budget_bytes:
            return g
    return 1


def _pick_row_tile(rows, max_rows=1024):
    """Row tile for pass 2: full slab if small, else a large divisor of rows."""
    if rows <= max_rows:
        return rows
    for t in (1024, 512, 256, 128, 64, 32, 16, 8):
        if rows % t == 0:
            return t
    return rows  # TODO(synk): ragged-row tiling; never hit for this module's sizes.


@functools.partial(jax.jit, static_argnames=("stride", "padding", "compute_dtype"))
def conv2d_batchnorm_relu(x_nchw, weight, bias, gamma, beta, *, stride=1,
                          padding=1, compute_dtype=jnp.float32):
    """Forward of conv2DBatchNormRelu. x_nchw: [N,Cin,H,W] -> [N,Cout,Ho,Wo]."""
    N, Cin, H, W = x_nchw.shape
    Cout, _, kh, kw = weight.shape
    Hp, Wp = H + 2 * padding, W + 2 * padding
    Ho = (Hp - kh) // stride + 1
    Wo = (Wp - kw) // stride + 1
    lanes = Wo * Cout

    # ---- layout glue: one pass over the activation (pre-pad once, channels last,
    #      (W, Cin) folded onto the lane axis).  No kh*kw duplication anywhere.
    xp = jnp.pad(x_nchw.astype(jnp.float32),
                 ((0, 0), (0, 0), (padding, padding), (padding, padding)))
    x2d = jnp.transpose(xp, (0, 2, 3, 1)).reshape(N, Hp, Wp * Cin).astype(compute_dtype)

    # ---- banded tap weights (weight-sized, built once):
    #      W_band[i, w_in*Cin+ci, wo*Cout+co] = weight[co, ci, i, w_in - wo*stride]
    w_t = jnp.transpose(weight.astype(jnp.float32), (2, 3, 1, 0))       # [kh,kw,Cin,Cout]
    sel = (jnp.arange(Wp)[None, :, None]
           == jnp.arange(Wo)[None, None, :] * stride
           + jnp.arange(kw)[:, None, None]).astype(jnp.float32)         # [kw,Wp,Wo]
    wband = jnp.einsum("jpw,ijcd->ipcwd", sel, w_t).reshape(kh, Wp * Cin, lanes)
    wband = wband.astype(compute_dtype)

    bias_row = jnp.tile(bias.astype(jnp.float32), Wo).reshape(1, lanes)

    # ---- samples per grid step (amortize per-step overhead; keep block in VMEM).
    in_itemsize = jnp.dtype(compute_dtype).itemsize
    per_sample_bytes = 2 * (Hp * Wp * Cin * in_itemsize          # double-buffered in
                            + Ho * lanes * 4 + 2 * lanes * 4)    # + conv/stats out
    G = _pick_samples_per_step(N, per_sample_bytes)

    # ---- pass 1: conv + bias + per-sample sum/sumsq partials ----------------
    conv_y, stats = pl.pallas_call(
        functools.partial(_conv_stats_kernel, kh=kh, stride=stride, group=G),
        grid=(N // G,),
        in_specs=[
            pl.BlockSpec((G, Hp, Wp * Cin), lambda n: (n, 0, 0)),
            pl.BlockSpec((kh, Wp * Cin, lanes), lambda n: (0, 0, 0)),
            pl.BlockSpec((1, lanes), lambda n: (0, 0)),
        ],
        out_specs=[
            pl.BlockSpec((G, Ho, lanes), lambda n: (n, 0, 0)),
            pl.BlockSpec((G, 2, lanes), lambda n: (n, 0, 0)),
        ],
        out_shape=[
            jax.ShapeDtypeStruct((N, Ho, lanes), jnp.float32),
            jax.ShapeDtypeStruct((N, 2, lanes), jnp.float32),
        ],
        compiler_params=pltpu.CompilerParams(dimension_semantics=("parallel",)),
    )(x2d, wband, bias_row)

    # ---- tiny finalize (wrapper glue, O(N*Wo*Cout)): batch mean/var, then
    #      precombined per-channel scale/shift for a single FMA in pass 2.
    m_total = N * Ho * Wo
    stats_c = stats.reshape(N, 2, Wo, Cout).sum(axis=(0, 2))            # [2, Cout]
    mean_c = stats_c[0] / m_total
    var_c = stats_c[1] / m_total - mean_c * mean_c                      # E[y^2]-E[y]^2
    scale_c = gamma.astype(jnp.float32) * jax.lax.rsqrt(var_c + BN_EPS)
    shift_c = beta.astype(jnp.float32) - mean_c * scale_c
    scale_row = jnp.tile(scale_c, Wo).reshape(1, lanes)
    shift_row = jnp.tile(shift_c, Wo).reshape(1, lanes)

    # ---- pass 2: normalize + ReLU, in place over the row-flattened conv buffer.
    R = N * Ho
    tr = _pick_row_tile(R)
    conv_flat = conv_y.reshape(R, lanes)                 # contiguous merge: free
    out_flat = pl.pallas_call(
        _bn_relu_kernel,
        grid=(R // tr,),
        in_specs=[
            pl.BlockSpec((tr, lanes), lambda r: (r, 0)),
            pl.BlockSpec((1, lanes), lambda r: (0, 0)),
            pl.BlockSpec((1, lanes), lambda r: (0, 0)),
        ],
        out_specs=pl.BlockSpec((tr, lanes), lambda r: (r, 0)),
        out_shape=jax.ShapeDtypeStruct((R, lanes), jnp.float32),
        input_output_aliases={0: 0},
        compiler_params=pltpu.CompilerParams(dimension_semantics=("parallel",)),
    )(conv_flat, scale_row, shift_row)

    # [N*Ho, Wo*Cout] -> NCHW for the PyTorch-layout consumer (layout glue only).
    return jnp.transpose(out_flat.reshape(N, Ho, Wo, Cout), (0, 3, 1, 2))


def _reference(x_nchw, weight, bias, gamma, beta, stride=1, padding=1):
    """Plain-JAX reference: lax conv + train-mode BN + ReLU."""
    conv = jax.lax.conv_general_dilated(
        x_nchw.astype(jnp.float32), weight.astype(jnp.float32),
        window_strides=(stride, stride),
        padding=((padding, padding), (padding, padding)),
        dimension_numbers=("NCHW", "OIHW", "NCHW"),
    ) + bias.reshape(1, -1, 1, 1)
    mean = jnp.mean(conv, axis=(0, 2, 3), keepdims=True)
    var = jnp.mean((conv - mean) ** 2, axis=(0, 2, 3), keepdims=True)
    bn = (conv - mean) * jax.lax.rsqrt(var + BN_EPS) * gamma.reshape(1, -1, 1, 1) \
        + beta.reshape(1, -1, 1, 1)
    return jnp.maximum(bn, 0.0)


if __name__ == "__main__":
    # Module config: conv2DBatchNormRelu(in_channels=4, n_filters=8, k_size=3,
    #                                    stride=1, padding=1, bias=True)
    N, Cin, H, W = 2, 4, 16, 16
    Cout, K = 8, 3
    stride, padding = 1, 1

    key = jax.random.PRNGKey(0)
    k_x, k_w, k_b = jax.random.split(key, 3)
    x = jax.random.normal(k_x, (N, Cin, H, W), dtype=jnp.float32)
    weight = jax.random.normal(k_w, (Cout, Cin, K, K), dtype=jnp.float32) * 0.1
    bias = jax.random.normal(k_b, (Cout,), dtype=jnp.float32) * 0.1
    gamma = jnp.ones((Cout,), dtype=jnp.float32)    # BatchNorm2d weight init
    beta = jnp.zeros((Cout,), dtype=jnp.float32)    # BatchNorm2d bias init

    ref = _reference(x, weight, bias, gamma, beta, stride=stride, padding=padding)

    # Strict-accuracy f32 path.
    out = conv2d_batchnorm_relu(x, weight, bias, gamma, beta,
                                stride=stride, padding=padding)
    out = jax.block_until_ready(out)
    assert out.shape == (N, Cout, H, W), out.shape
    assert jnp.allclose(out, ref, atol=1e-4, rtol=1e-4), \
        float(jnp.max(jnp.abs(out - ref)))

    # bf16 MXU-input path (f32 accumulation / BN math) — loose-tolerance smoke test.
    out_bf16 = conv2d_batchnorm_relu(x, weight, bias, gamma, beta, stride=stride,
                                     padding=padding, compute_dtype=jnp.bfloat16)
    out_bf16 = jax.block_until_ready(out_bf16)
    assert jnp.allclose(out_bf16, ref, atol=1e-1, rtol=1e-1), \
        float(jnp.max(jnp.abs(out_bf16 - ref)))

    print("KERNEL_OK")
</pallas_src>

<mosaic_0001>
module attributes {stable_mosaic.version = 11 : i64} {
  func.func @_conv_stats_kernel(%arg0: i32, %arg1: memref<2x18x72xf32, #tpu.memory_space<vmem>>, %arg2: memref<3x72x128xf32, #tpu.memory_space<vmem>>, %arg3: memref<1x128xf32, #tpu.memory_space<vmem>>, %arg4: memref<2x16x128xf32, #tpu.memory_space<vmem>>, %arg5: memref<2x2x128xf32, #tpu.memory_space<vmem>>) attributes {dimension_semantics = [#tpu.dimension_semantics<parallel>], iteration_bounds = array<i64: 1>, scalar_prefetch = 0 : i64, scratch_operands = 0 : i64, tpu.core_type = #tpu.core_type<tc>, window_params = [{transform_indices = @transform_0, window_bounds = array<i64: 2, 18, 72>}, {pipeline_mode = #tpu.pipeline_mode<synchronous>, transform_indices = @transform_1, window_bounds = array<i64: 3, 72, 128>}, {pipeline_mode = #tpu.pipeline_mode<synchronous>, transform_indices = @transform_2, window_bounds = array<i64: 1, 128>}, {transform_indices = @transform_3, window_bounds = array<i64: 2, 16, 128>}, {transform_indices = @transform_4, window_bounds = array<i64: 2, 2, 128>}]} {
    %c0 = arith.constant 0 : index
    %c0_0 = arith.constant 0 : index
    %0 = vector.load %arg3[%c0, %c0_0] : memref<1x128xf32, #tpu.memory_space<vmem>>, vector<1x128xf32>
    %c0_1 = arith.constant 0 : index
    %c0_2 = arith.constant 0 : index
    %c0_3 = arith.constant 0 : index
    %1 = vector.load %arg1[%c0_1, %c0_2, %c0_3] : memref<2x18x72xf32, #tpu.memory_space<vmem>>, vector<1x18x72xf32>
    %2 = vector.shape_cast %1 : vector<1x18x72xf32> to vector<18x72xf32>
    %cst = arith.constant 0.000000e+00 : f32
    %3 = vector.broadcast %cst : f32 to vector<16x128xf32>
    %4 = vector.extract_strided_slice %2 {offsets = [0, 0], sizes = [16, 72], strides = [1, 1]} : vector<18x72xf32> to vector<16x72xf32>
    %c0_4 = arith.constant 0 : index
    %c0_5 = arith.constant 0 : index
    %c0_6 = arith.constant 0 : index
    %5 = vector.load %arg2[%c0_4, %c0_5, %c0_6] : memref<3x72x128xf32, #tpu.memory_space<vmem>>, vector<1x72x128xf32>
    %6 = vector.shape_cast %5 : vector<1x72x128xf32> to vector<72x128xf32>
    %cst_7 = arith.constant dense<0.000000e+00> : vector<16x128xf32>
    %7 = tpu.matmul %4, %6, %cst_7 {dimension_numbers = #tpu.dot_dimension_numbers<[1], [0], [0], [1], [0, 0, 1, 1], [], []>} : vector<16x72xf32>, vector<72x128xf32>, vector<16x128xf32> -> vector<16x128xf32>
    %8 = arith.addf %3, %7 : vector<16x128xf32>
    %9 = vector.extract_strided_slice %2 {offsets = [1, 0], sizes = [16, 72], strides = [1, 1]} : vector<18x72xf32> to vector<16x72xf32>
    %c1 = arith.constant 1 : index
    %c0_8 = arith.constant 0 : index
    %c0_9 = arith.constant 0 : index
    %10 = vector.load %arg2[%c1, %c0_8, %c0_9] : memref<3x72x128xf32, #tpu.memory_space<vmem>>, vector<1x72x128xf32>
    %11 = vector.shape_cast %10 : vector<1x72x128xf32> to vector<72x128xf32>
    %cst_10 = arith.constant dense<0.000000e+00> : vector<16x128xf32>
    %12 = tpu.matmul %9, %11, %cst_10 {dimension_numbers = #tpu.dot_dimension_numbers<[1], [0], [0], [1], [0, 0, 1, 1], [], []>} : vector<16x72xf32>, vector<72x128xf32>, vector<16x128xf32> -> vector<16x128xf32>
    %13 = arith.addf %8, %12 : vector<16x128xf32>
    %14 = vector.extract_strided_slice %2 {offsets = [2, 0], sizes = [16, 72], strides = [1, 1]} : vector<18x72xf32> to vector<16x72xf32>
    %c2 = arith.constant 2 : index
    %c0_11 = arith.constant 0 : index
    %c0_12 = arith.constant 0 : index
    %15 = vector.load %arg2[%c2, %c0_11, %c0_12] : memref<3x72x128xf32, #tpu.memory_space<vmem>>, vector<1x72x128xf32>
    %16 = vector.shape_cast %15 : vector<1x72x128xf32> to vector<72x128xf32>
    %cst_13 = arith.constant dense<0.000000e+00> : vector<16x128xf32>
    %17 = tpu.matmul %14, %16, %cst_13 {dimension_numbers = #tpu.dot_dimension_numbers<[1], [0], [0], [1], [0, 0, 1, 1], [], []>} : vector<16x72xf32>, vector<72x128xf32>, vector<16x128xf32> -> vector<16x128xf32>
    %18 = arith.addf %13, %17 : vector<16x128xf32>
    %19 = vector.broadcast %0 : vector<1x128xf32> to vector<16x128xf32>
    %20 = arith.addf %18, %19 : vector<16x128xf32>
    %c0_14 = arith.constant 0 : index
    %c0_15 = arith.constant 0 : index
    %c0_16 = arith.constant 0 : index
    %21 = vector.load %arg4[%c0_14, %c0_15, %c0_16] : memref<2x16x128xf32, #tpu.memory_space<vmem>>, vector<1x16x128xf32>
    %22 = vector.shape_cast %21 : vector<1x16x128xf32> to vector<16x128xf32>
    %23 = vector.shape_cast %20 : vector<16x128xf32> to vector<1x16x128xf32>
    tpu.vector_store %arg4[%c0_14, %c0_15, %c0_16], %23 {strides = array<i32>} : memref<2x16x128xf32, #tpu.memory_space<vmem>>, vector<1x16x128xf32>,
    %cst_17 = arith.constant dense<0.000000e+00> : vector<128xf32>
    %24 = vector.multi_reduction <add>, %20, %cst_17 [0] : vector<16x128xf32> to vector<128xf32>
    %25 = vector.shape_cast %24 : vector<128xf32> to vector<1x128xf32>
    %26 = arith.mulf %20, %20 : vector<16x128xf32>
    %cst_18 = arith.constant dense<0.000000e+00> : vector<128xf32>
    %27 = vector.multi_reduction <add>, %26, %cst_18 [0] : vector<16x128xf32> to vector<128xf32>
    %28 = vector.shape_cast %27 : vector<128xf32> to vector<1x128xf32>
    %29 = tpu.concatenate %25, %28 in 0 : vector<1x128xf32>, vector<1x128xf32> -> vector<2x128xf32>
    %c0_19 = arith.constant 0 : index
    %c0_20 = arith.constant 0 : index
    %c0_21 = arith.constant 0 : index
    %30 = vector.load %arg5[%c0_19, %c0_20, %c0_21] : memref<2x2x128xf32, #tpu.memory_space<vmem>>, vector<1x2x128xf32>
    %31 = vector.shape_cast %30 : vector<1x2x128xf32> to vector<2x128xf32>
    %32 = vector.shape_cast %29 : vector<2x128xf32> to vector<1x2x128xf32>
    tpu.vector_store %arg5[%c0_19, %c0_20, %c0_21], %32 {strides = array<i32>} : memref<2x2x128xf32, #tpu.memory_space<vmem>>, vector<1x2x128xf32>,
    %c1_22 = arith.constant 1 : index
    %c0_23 = arith.constant 0 : index
    %c0_24 = arith.constant 0 : index
    %33 = vector.load %arg1[%c1_22, %c0_23, %c0_24] : memref<2x18x72xf32, #tpu.memory_space<vmem>>, vector<1x18x72xf32>
    %34 = vector.shape_cast %33 : vector<1x18x72xf32> to vector<18x72xf32>
    %cst_25 = arith.constant 0.000000e+00 : f32
    %35 = vector.broadcast %cst_25 : f32 to vector<16x128xf32>
    %36 = vector.extract_strided_slice %34 {offsets = [0, 0], sizes = [16, 72], strides = [1, 1]} : vector<18x72xf32> to vector<16x72xf32>
    %c0_26 = arith.constant 0 : index
    %c0_27 = arith.constant 0 : index
    %c0_28 = arith.constant 0 : index
    %37 = vector.load %arg2[%c0_26, %c0_27, %c0_28] : memref<3x72x128xf32, #tpu.memory_space<vmem>>, vector<1x72x128xf32>
    %38 = vector.shape_cast %37 : vector<1x72x128xf32> to vector<72x128xf32>
    %cst_29 = arith.constant dense<0.000000e+00> : vector<16x128xf32>
    %39 = tpu.matmul %36, %38, %cst_29 {dimension_numbers = #tpu.dot_dimension_numbers<[1], [0], [0], [1], [0, 0, 1, 1], [], []>} : vector<16x72xf32>, vector<72x128xf32>, vector<16x128xf32> -> vector<16x128xf32>
    %40 = arith.addf %35, %39 : vector<16x128xf32>
    %41 = vector.extract_strided_slice %34 {offsets = [1, 0], sizes = [16, 72], strides = [1, 1]} : vector<18x72xf32> to vector<16x72xf32>
    %c1_30 = arith.constant 1 : index
    %c0_31 = arith.constant 0 : index
    %c0_32 = arith.constant 0 : index
    %42 = vector.load %arg2[%c1_30, %c0_31, %c0_32] : memref<3x72x128xf32, #tpu.memory_space<vmem>>, vector<1x72x128xf32>
    %43 = vector.shape_cast %42 : vector<1x72x128xf32> to vector<72x128xf32>
    %cst_33 = arith.constant dense<0.000000e+00> : vector<16x128xf32>
    %44 = tpu.matmul %41, %43, %cst_33 {dimension_numbers = #tpu.dot_dimension_numbers<[1], [0], [0], [1], [0, 0, 1, 1], [], []>} : vector<16x72xf32>, vector<72x128xf32>, vector<16x128xf32> -> vector<16x128xf32>
    %45 = arith.addf %40, %44 : vector<16x128xf32>
    %46 = vector.extract_strided_slice %34 {offsets = [2, 0], sizes = [16, 72], strides = [1, 1]} : vector<18x72xf32> to vector<16x72xf32>
    %c2_34 = arith.constant 2 : index
    %c0_35 = arith.constant 0 : index
    %c0_36 = arith.constant 0 : index
    %47 = vector.load %arg2[%c2_34, %c0_35, %c0_36] : memref<3x72x128xf32, #tpu.memory_space<vmem>>, vector<1x72x128xf32>
    %48 = vector.shape_cast %47 : vector<1x72x128xf32> to vector<72x128xf32>
    %cst_37 = arith.constant dense<0.000000e+00> : vector<16x128xf32>
    %49 = tpu.matmul %46, %48, %cst_37 {dimension_numbers = #tpu.dot_dimension_numbers<[1], [0], [0], [1], [0, 0, 1, 1], [], []>} : vector<16x72xf32>, vector<72x128xf32>, vector<16x128xf32> -> vector<16x128xf32>
    %50 = arith.addf %45, %49 : vector<16x128xf32>
    %51 = vector.broadcast %0 : vector<1x128xf32> to vector<16x128xf32>
    %52 = arith.addf %50, %51 : vector<16x128xf32>
    %c1_38 = arith.constant 1 : index
    %c0_39 = arith.constant 0 : index
    %c0_40 = arith.constant 0 : index
    %53 = vector.load %arg4[%c1_38, %c0_39, %c0_40] : memref<2x16x128xf32, #tpu.memory_space<vmem>>, vector<1x16x128xf32>
    %54 = vector.shape_cast %53 : vector<1x16x128xf32> to vector<16x128xf32>
    %55 = vector.shape_cast %52 : vector<16x128xf32> to vector<1x16x128xf32>
    tpu.vector_store %arg4[%c1_38, %c0_39, %c0_40], %55 {strides = array<i32>} : memref<2x16x128xf32, #tpu.memory_space<vmem>>, vector<1x16x128xf32>,
    %cst_41 = arith.constant dense<0.000000e+00> : vector<128xf32>
    %56 = vector.multi_reduction <add>, %52, %cst_41 [0] : vector<16x128xf32> to vector<128xf32>
    %57 = vector.shape_cast %56 : vector<128xf32> to vector<1x128xf32>
    %58 = arith.mulf %52, %52 : vector<16x128xf32>
    %cst_42 = arith.constant dense<0.000000e+00> : vector<128xf32>
    %59 = vector.multi_reduction <add>, %58, %cst_42 [0] : vector<16x128xf32> to vector<128xf32>
    %60 = vector.shape_cast %59 : vector<128xf32> to vector<1x128xf32>
    %61 = tpu.concatenate %57, %60 in 0 : vector<1x128xf32>, vector<1x128xf32> -> vector<2x128xf32>
    %c1_43 = arith.constant 1 : index
    %c0_44 = arith.constant 0 : index
    %c0_45 = arith.constant 0 : index
    %62 = vector.load %arg5[%c1_43, %c0_44, %c0_45] : memref<2x2x128xf32, #tpu.memory_space<vmem>>, vector<1x2x128xf32>
    %63 = vector.shape_cast %62 : vector<1x2x128xf32> to vector<2x128xf32>
    %64 = vector.shape_cast %61 : vector<2x128xf32> to vector<1x2x128xf32>
    tpu.vector_store %arg5[%c1_43, %c0_44, %c0_45], %64 {strides = array<i32>} : memref<2x2x128xf32, #tpu.memory_space<vmem>>, vector<1x2x128xf32>,
    return
  }
  func.func @transform_0(%arg0: i32) -> (i32, i32, i32) {
    %c0_i32 = arith.constant 0 : i32
    %c0_i32_0 = arith.constant 0 : i32
    %c0_i32_1 = arith.constant 0 : i32
    return %arg0, %c0_i32, %c0_i32_0 : i32, i32, i32
  }
  func.func @transform_1(%arg0: i32) -> (i32, i32, i32) {
    %c0_i32 = arith.constant 0 : i32
    %c0_i32_0 = arith.constant 0 : i32
    %c0_i32_1 = arith.constant 0 : i32
    %c0_i32_2 = arith.constant 0 : i32
    return %c0_i32, %c0_i32_0, %c0_i32_1 : i32, i32, i32
  }
  func.func @transform_2(%arg0: i32) -> (i32, i32) {
    %c0_i32 = arith.constant 0 : i32
    %c0_i32_0 = arith.constant 0 : i32
    %c0_i32_1 = arith.constant 0 : i32
    return %c0_i32, %c0_i32_0 : i32, i32
  }
  func.func @transform_3(%arg0: i32) -> (i32, i32, i32) {
    %c0_i32 = arith.constant 0 : i32
    %c0_i32_0 = arith.constant 0 : i32
    %c0_i32_1 = arith.constant 0 : i32
    return %arg0, %c0_i32, %c0_i32_0 : i32, i32, i32
  }
  func.func @transform_4(%arg0: i32) -> (i32, i32, i32) {
    %c0_i32 = arith.constant 0 : i32
    %c0_i32_0 = arith.constant 0 : i32
    %c0_i32_1 = arith.constant 0 : i32
    return %arg0, %c0_i32, %c0_i32_0 : i32, i32, i32
  }
}

module attributes {stable_mosaic.version = 11 : i64} {
  func.func @_bn_relu_kernel(%arg0: i32, %arg1: memref<32x128xf32, #tpu.memory_space<vmem>>, %arg2: memref<1x128xf32, #tpu.memory_space<vmem>>, %arg3: memref<1x128xf32, #tpu.memory_space<vmem>>, %arg4: memref<32x128xf32, #tpu.memory_space<vmem>>) attributes {dimension_semantics = [#tpu.dimension_semantics<parallel>], iteration_bounds = array<i64: 1>, scalar_prefetch = 0 : i64, scratch_operands = 0 : i64, tpu.core_type = #tpu.core_type<tc>, window_params = [{transform_indices = @transform_0, window_bounds = array<i64: 32, 128>}, {pipeline_mode = #tpu.pipeline_mode<synchronous>, transform_indices = @transform_1, window_bounds = array<i64: 1, 128>}, {pipeline_mode = #tpu.pipeline_mode<synchronous>, transform_indices = @transform_2, window_bounds = array<i64: 1, 128>}, {transform_indices = @transform_3, window_bounds = array<i64: 32, 128>}]} {
    %c0 = arith.constant 0 : index
    %c0_0 = arith.constant 0 : index
    %0 = vector.load %arg1[%c0, %c0_0] : memref<32x128xf32, #tpu.memory_space<vmem>>, vector<32x128xf32>
    %c0_1 = arith.constant 0 : index
    %c0_2 = arith.constant 0 : index
    %1 = vector.load %arg2[%c0_1, %c0_2] : memref<1x128xf32, #tpu.memory_space<vmem>>, vector<1x128xf32>
    %2 = vector.broadcast %1 : vector<1x128xf32> to vector<32x128xf32>
    %3 = arith.mulf %0, %2 : vector<32x128xf32>
    %c0_3 = arith.constant 0 : index
    %c0_4 = arith.constant 0 : index
    %4 = vector.load %arg3[%c0_3, %c0_4] : memref<1x128xf32, #tpu.memory_space<vmem>>, vector<1x128xf32>
    %5 = vector.broadcast %4 : vector<1x128xf32> to vector<32x128xf32>
    %6 = arith.addf %3, %5 : vector<32x128xf32>
    %cst = arith.constant 0.000000e+00 : f32
    %7 = vector.broadcast %cst : f32 to vector<32x128xf32>
    %8 = arith.maximumf %6, %7 : vector<32x128xf32>
    %c0_5 = arith.constant 0 : index
    %c0_6 = arith.constant 0 : index
    %9 = vector.load %arg4[%c0_5, %c0_6] : memref<32x128xf32, #tpu.memory_space<vmem>>, vector<32x128xf32>
    tpu.vector_store %arg4[%c0_5, %c0_6], %8 {strides = array<i32>} : memref<32x128xf32, #tpu.memory_space<vmem>>, vector<32x128xf32>,
    return
  }
  func.func @transform_0(%arg0: i32) -> (i32, i32) {
    %c0_i32 = arith.constant 0 : i32
    %c0_i32_0 = arith.constant 0 : i32
    return %arg0, %c0_i32 : i32, i32
  }
  func.func @transform_1(%arg0: i32) -> (i32, i32) {
    %c0_i32 = arith.constant 0 : i32
    %c0_i32_0 = arith.constant 0 : i32
    %c0_i32_1 = arith.constant 0 : i32
    return %c0_i32, %c0_i32_0 : i32, i32
  }
  func.func @transform_2(%arg0: i32) -> (i32, i32) {
    %c0_i32 = arith.constant 0 : i32
    %c0_i32_0 = arith.constant 0 : i32
    %c0_i32_1 = arith.constant 0 : i32
    return %c0_i32, %c0_i32_0 : i32, i32
  }
  func.func @transform_3(%arg0: i32) -> (i32, i32) {
    %c0_i32 = arith.constant 0 : i32
    %c0_i32_0 = arith.constant 0 : i32
    return %arg0, %c0_i32 : i32, i32
  }
}

</mosaic_0001>

<llo_original>
// kernel: tile.18
$region0: #{tile.18}
  #allocation0 [shape = 's32[1]{0}', space=sflag, size = 0x4, scoped, tag = 'scoped memory for tile.18']
  %s0 = inlined_call_operand.vmem [shape: f32[8], index: 0, kind: input, shape index: {}]
  %s1 = inlined_call_operand.vmem [shape: f32[16,8], index: 1, kind: output, shape index: {}]
  // Predicated region
  $region2: #{tile.18} parent=0 // pred_check
    _
  $region3: #{tile.18} parent=0 // pred_check_branch
    %3 = sbr.rel (0) target = $region5
  $region4: #{tile.18} parent=0 // pred_region
    _
  $region5: #{tile.18} parent=0 // pred_fallthru
    _
  %v4 = vld [vmem:[%s0] ss:$0 sm:$0xff]
  %5 = vst [vmem:[%s1] sm:$0xff] %v4
  %s6 = scalar_lea.vmem %s1, 8
  %7 = vst [vmem:[%s6] sm:$0xff] %v4

// kernel: tile.19
$region0: #{tile.19}
  %s0 = inlined_call_operand.vmem [shape: f32[16,8], index: 0, kind: input, shape index: {}]
  %s1 = inlined_call_operand.vmem [shape: f32[1,128], index: 1, kind: output, shape index: {}]
  $region1: #{tile.19} parent=0
    #allocation0 [shape = 'u8[4096]{0}', space=vmem, size = 0x1000, scoped, tag = 'scoped mem for output reshape']
    %v2 = vld [vmem:[%s0] sm:$0x1]
    %vm3 = vcmask 64512
    %4 = vst.msk [vmem:[#allocation0] sm:$0x1] %vm3, %v2
    %s5 = scalar_lea.vmem %s0, 15
    %v6 = vld [vmem:[%s5] sm:$0x1]
    %7 = vrot.lane.b32.xlu0 %v6, 120
    %v8 = vpop.permute.xlu0 %7
    %vm9 = vcmask 1048512
    %10 = vst.msk [vmem:[#allocation0] sm:$0x1] %vm9, %v8
    %s11 = scalar_lea.vmem %s0, 14
    %v12 = vld [vmem:[%s11] sm:$0x1]
    %13 = vrot.lane.b32.xlu0 %v12, 112
    %v14 = vpop.permute.xlu0 %13
    %vm15 = vcmask 982912
    %16 = vst.msk [vmem:[#allocation0] sm:$0x1] %vm15, %v14
    %s17 = scalar_lea.vmem %s0, 13
    %v18 = vld [vmem:[%s17] sm:$0x1]
    %19 = vrot.lane.b32.xlu0 %v18, 104
    %v20 = vpop.permute.xlu0 %19
    %vm21 = vcmask 917312
    %22 = vst.msk [vmem:[#allocation0] sm:$0x1] %vm21, %v20
    %s23 = scalar_lea.vmem %s0, 12
    %v24 = vld [vmem:[%s23] sm:$0x1]
    %25 = vrot.lane.b32.xlu0 %v24, 96
    %v26 = vpop.permute.xlu0 %25
    %vm27 = vcmask 851712
    %28 = vst.msk [vmem:[#allocation0] sm:$0x1] %vm27, %v26
    %s29 = scalar_lea.vmem %s0, 11
    %v30 = vld [vmem:[%s29] sm:$0x1]
    %31 = vrot.lane.b32.xlu0 %v30, 88
    %v32 = vpop.permute.xlu0 %31
    %vm33 = vcmask 786112
    %34 = vst.msk [vmem:[#allocation0] sm:$0x1] %vm33, %v32
    %s35 = scalar_lea.vmem %s0, 10
    %v36 = vld [vmem:[%s35] sm:$0x1]
    %37 = vrot.lane.b32.xlu0 %v36, 80
    %v38 = vpop.permute.xlu0 %37
    %vm39 = vcmask 720512
    %40 = vst.msk [vmem:[#allocation0] sm:$0x1] %vm39, %v38
    %s41 = scalar_lea.vmem %s0, 9
    %v42 = vld [vmem:[%s41] sm:$0x1]
    %43 = vrot.lane.b32.xlu0 %v42, 72
    %v44 = vpop.permute.xlu0 %43
    %vm45 = vcmask 654912
    %46 = vst.msk [vmem:[#allocation0] sm:$0x1] %vm45, %v44
    %s47 = scalar_lea.vmem %s0, 8
    %v48 = vld [vmem:[%s47] sm:$0x1]
    %49 = vrot.lane.b32.xlu0 %v48, 64
    %v50 = vpop.permute.xlu0 %49
    %vm51 = vcmask 589312
    %52 = vst.msk [vmem:[#allocation0] sm:$0x1] %vm51, %v50
    %s53 = scalar_lea.vmem %s0, 7
    %v54 = vld [vmem:[%s53] sm:$0x1]
    %55 = vrot.lane.b32.xlu0 %v54, 56
    %v56 = vpop.permute.xlu0 %55
    %vm57 = vcmask 523712
    %58 = vst.msk [vmem:[#allocation0] sm:$0x1] %vm57, %v56
    %s59 = scalar_lea.vmem %s0, 6
    %v60 = vld [vmem:[%s59] sm:$0x1]
    %61 = vrot.lane.b32.xlu0 %v60, 48
    %v62 = vpop.permute.xlu0 %61
    %vm63 = vcmask 458112
    %64 = vst.msk [vmem:[#allocation0] sm:$0x1] %vm63, %v62
    %s65 = scalar_lea.vmem %s0, 5
    %v66 = vld [vmem:[%s65] sm:$0x1]
    %67 = vrot.lane.b32.xlu0 %v66, 40
    %v68 = vpop.permute.xlu0 %67
    %vm69 = vcmask 392512
    %70 = vst.msk [vmem:[#allocation0] sm:$0x1] %vm69, %v68
    %s71 = scalar_lea.vmem %s0, 4
    %v72 = vld [vmem:[%s71] sm:$0x1]
    %73 = vrot.lane.b32.xlu0 %v72, 32
    %v74 = vpop.permute.xlu0 %73
    %vm75 = vcmask 326912
    %76 = vst.msk [vmem:[#allocation0] sm:$0x1] %vm75, %v74
    %s77 = scalar_lea.vmem %s0, 3
    %v78 = vld [vmem:[%s77] sm:$0x1]
    %79 = vrot.lane.b32.xlu0 %v78, 24
    %v80 = vpop.permute.xlu0 %79
    %vm81 = vcmask 261312
    %82 = vst.msk [vmem:[#allocation0] sm:$0x1] %vm81, %v80
    %s83 = scalar_lea.vmem %s0, 2
    %v84 = vld [vmem:[%s83] sm:$0x1]
    %85 = vrot.lane.b32.xlu0 %v84, 16
    %v86 = vpop.permute.xlu0 %85
    %vm87 = vcmask 195712
    %88 = vst.msk [vmem:[#allocation0] sm:$0x1] %vm87, %v86
    %s89 = scalar_lea.vmem %s0, 1
    %v90 = vld [vmem:[%s89] sm:$0x1]
    %91 = vrot.lane.b32.xlu0 %v90, 8
    %v92 = vpop.permute.xlu0 %91
    %vm93 = vcmask 130112
    %94 = vst.msk [vmem:[#allocation0] sm:$0x1] %vm93, %v92
    %s96 = ssub.s32 2, 1
    %v97 = vld [vmem:[#allocation0] sm:%s96]
    %s99 = ssub.s32 2, 1
    %100 = vst [vmem:[%s1] sm:%s99] %v97

// kernel: conv2d_batchnorm_relu.3
$region0: #{conv2d_batchnorm_relu.3}
  #allocation0 [shape = 'u32[]', space=smem, size = 0x4, offset = 0x4, fixed_abs, tag = 'smem constant byte address 0x4 - core index']
  #allocation1 [shape = 'u32[72,128]{1,0:T(1,128)}', space=vmem, size = 0x9000, scoped, tag = 'internal scratch']
  %s0 = inlined_call_operand.vmem [shape: f32[32,128], index: 0, kind: input, shape index: {}, may-alias: {0,3}]
  %s1 = inlined_call_operand.vmem [shape: f32[1,128], index: 1, kind: input, shape index: {}]
  %s2 = inlined_call_operand.vmem [shape: f32[1,128], index: 2, kind: input, shape index: {}]
  %s3 = inlined_call_operand.vmem [shape: f32[32,128], index: 3, kind: output, shape index: {}, may-alias: {0,3}]
  %s4 = sld [smem:[#allocation0]]
  $region22: #{conv2d_batchnorm_relu.3} parent=0
    _
  %s6 = ssub.s32 1, %s4
  %s7 = scalar_select 0, %s6, %s4
  // Predicated region
  $region2: #{conv2d_batchnorm_relu.3} parent=0 // pred_check
    _
  $region3: #{conv2d_batchnorm_relu.3} parent=0 // pred_check_branch
    %9 = sbr.rel (0) target = $region5
  $region4: #{conv2d_batchnorm_relu.3} parent=0 // pred_region
    _
  $region5: #{conv2d_batchnorm_relu.3} parent=0 // pred_fallthru
    _
  // Predicated region
  $region6: #{conv2d_batchnorm_relu.3} parent=0 // pred_check
    _
  $region7: #{conv2d_batchnorm_relu.3} parent=0 // pred_check_branch
    %11 = sbr.rel (0) target = $region9
  $region8: #{conv2d_batchnorm_relu.3} parent=0 // pred_region
    _
  $region9: #{conv2d_batchnorm_relu.3} parent=0 // pred_fallthru
    _
  // Predicated region
  $region10: #{conv2d_batchnorm_relu.3} parent=0 // pred_check
    _
  $region11: #{conv2d_batchnorm_relu.3} parent=0 // pred_check_branch
    %13 = sbr.rel (0) target = $region13
  $region12: #{conv2d_batchnorm_relu.3} parent=0 // pred_region
    _
  $region13: #{conv2d_batchnorm_relu.3} parent=0 // pred_fallthru
    _
  %v14 = vld [vmem:[%s0] sm:$0xff]
  %v15 = vld [vmem:[%s0 + $0x8] sm:$0xff]
  %v16 = vld [vmem:[%s0 + $0x10] sm:$0xff]
  %v17 = vld [vmem:[%s0 + $0x18] sm:$0xff]
  %v18 = vld [vmem:[%s1] sm:$0x1]
  %v20 = vperm.slane %v18, 0
  %v22 = vmul.f32 %v14, %v20
  %v23 = vmul.f32 %v15, %v20
  %v24 = vmul.f32 %v16, %v20
  %v25 = vmul.f32 %v17, %v20
  %v26 = vld [vmem:[%s2] sm:$0x1]
  %v28 = vperm.slane %v26, 0
  %v30 = vadd.f32 %v22, %v28
  %v31 = vadd.f32 %v23, %v28
  %v32 = vadd.f32 %v24, %v28
  %v33 = vadd.f32 %v25, %v28
  %v34 = vmax.f32 %v30, 0.0
  %v35 = vmax.f32 %v31, 0.0
  %v36 = vmax.f32 %v32, 0.0
  %v37 = vmax.f32 %v33, 0.0
  %38 = vst [vmem:[%s3] sm:$0xff] %v34
  %39 = vst [vmem:[%s3 + $0x8] sm:$0xff] %v35
  %40 = vst [vmem:[%s3 + $0x10] sm:$0xff] %v36
  %41 = vst [vmem:[%s3 + $0x18] sm:$0xff] %v37
  // Predicated region
  $region14: #{conv2d_batchnorm_relu.3} parent=0 // pred_check
    _
  $region15: #{conv2d_batchnorm_relu.3} parent=0 // pred_check_branch
    %43 = sbr.rel (0) target = $region17
  $region16: #{conv2d_batchnorm_relu.3} parent=0 // pred_region
    _
  $region17: #{conv2d_batchnorm_relu.3} parent=0 // pred_fallthru
    _
  // Predicated region
  $region18: #{conv2d_batchnorm_relu.3} parent=0 // pred_check
    _
  $region19: #{conv2d_batchnorm_relu.3} parent=0 // pred_check_branch
    %45 = sbr.rel (0) target = $region21
  $region20: #{conv2d_batchnorm_relu.3} parent=0 // pred_region
    _
  $region21: #{conv2d_batchnorm_relu.3} parent=0 // pred_fallthru
    _

// kernel: conv2d_batchnorm_relu.2
$region0: #{conv2d_batchnorm_relu.2}
  #allocation0 [shape = 'u32[]', space=smem, size = 0x4, offset = 0x4, fixed_abs, tag = 'smem constant byte address 0x4 - core index']
  #allocation1 [shape = 'u32[72,128]{1,0:T(1,128)}', space=vmem, size = 0x9000, scoped, tag = 'internal scratch']
  %s0 = inlined_call_operand.vmem [shape: f32[2,18,72], index: 0, kind: input, shape index: {}]
  %s1 = inlined_call_operand.vmem [shape: f32[3,72,128], index: 1, kind: input, shape index: {}]
  %s2 = inlined_call_operand.vmem [shape: f32[1,128], index: 2, kind: input, shape index: {}]
  %s3 = inlined_call_operand.vmem [shape: f32[2,16,128], index: 3, kind: output, shape index: {0}]
  %s4 = inlined_call_operand.vmem [shape: f32[2,2,128], index: 4, kind: output, shape index: {1}]
  %5 = xla_tuple %s3, %s4
  %s6 = sld [smem:[#allocation0]]
  $region30: #{conv2d_batchnorm_relu.2} parent=0
    _
  %s8 = ssub.s32 1, %s6
  %s9 = scalar_select 0, %s8, %s6
  // Predicated region
  $region2: #{conv2d_batchnorm_relu.2} parent=0 // pred_check
    _
  $region3: #{conv2d_batchnorm_relu.2} parent=0 // pred_check_branch
    %11 = sbr.rel (0) target = $region5
  $region4: #{conv2d_batchnorm_relu.2} parent=0 // pred_region
    _
  $region5: #{conv2d_batchnorm_relu.2} parent=0 // pred_fallthru
    _
  // Predicated region
  $region6: #{conv2d_batchnorm_relu.2} parent=0 // pred_check
    _
  $region7: #{conv2d_batchnorm_relu.2} parent=0 // pred_check_branch
    %13 = sbr.rel (0) target = $region9
  $region8: #{conv2d_batchnorm_relu.2} parent=0 // pred_region
    _
  $region9: #{conv2d_batchnorm_relu.2} parent=0 // pred_fallthru
    _
  // Predicated region
  $region10: #{conv2d_batchnorm_relu.2} parent=0 // pred_check
    _
  $region11: #{conv2d_batchnorm_relu.2} parent=0 // pred_check_branch
    %15 = sbr.rel (0) target = $region13
  $region12: #{conv2d_batchnorm_relu.2} parent=0 // pred_region
    _
  $region13: #{conv2d_batchnorm_relu.2} parent=0 // pred_fallthru
    _
  %v16 = vld [vmem:[%s2] sm:$0x1]
  %v17 = vld [vmem:[%s0] sm:$0xff]
  %v18 = vld [vmem:[%s0 + $0x8] sm:$0xff]
  %v19 = vld [vmem:[%s0 + $0x10] sm:$0x3]
  %v20 = vld [vmem:[%s1] sm:$0xff]
  %v21 = vld [vmem:[%s1 + $0x8] sm:$0xff]
  %v22 = vld [vmem:[%s1 + $0x10] sm:$0xff]
  %v23 = vld [vmem:[%s1 + $0x18] sm:$0xff]
  %v24 = vld [vmem:[%s1 + $0x20] sm:$0xff]
  %v25 = vld [vmem:[%s1 + $0x28] sm:$0xff]
  %v26 = vld [vmem:[%s1 + $0x30] sm:$0xff]
  %v27 = vld [vmem:[%s1 + $0x38] sm:$0xff]
  %v28 = vld [vmem:[%s1 + $0x40] sm:$0xff]
  %s29 = scalar_lea.vmem %s1, 72
  %v30 = vld [vmem:[%s29] sm:$0xff]
  %v31 = vld [vmem:[%s29 + $0x8] sm:$0xff]
  %v32 = vld [vmem:[%s29 + $0x10] sm:$0xff]
  %v33 = vld [vmem:[%s29 + $0x18] sm:$0xff]
  %v34 = vld [vmem:[%s29 + $0x20] sm:$0xff]
  %v35 = vld [vmem:[%s29 + $0x28] sm:$0xff]
  %v36 = vld [vmem:[%s29 + $0x30] sm:$0xff]
  %v37 = vld [vmem:[%s29 + $0x38] sm:$0xff]
  %v38 = vld [vmem:[%s29 + $0x40] sm:$0xff]
  %vm42 = vcmask 1046528
  %v43 = vrot.slane %v17, 1
  %v44 = vrot.slane %v18, 1
  %v45 = vsel %vm42, %v43, %v44
  %v46 = vrot.slane %v19, 1
  %v47 = vsel %vm42, %v44, %v46
  %vm48 = vcmask 588800
  %v49 = vsel %vm48, %v45, 0
  %v51 = vsel %vm48, %v47, 0
  %53 = vmatpush.msra.mxu0 0.0
  %54 = vmatpush.msra.mxu0 0.0
  %55 = vmatpush.msra.mxu0 0.0
  %56 = vmatpush.msra.mxu0 0.0
  %57 = vmatpush.msra.mxu0 0.0
  %58 = vmatpush.msra.mxu0 0.0
  %59 = vmatpush.msra.mxu0 0.0
  %60 = vmatpush.msra.mxu0 %v38
  %61 = vmatpush.msra.mxu0 %v37
  %62 = vmatpush.msra.mxu0 %v36
  %63 = vmatpush.msra.mxu0 %v35
  %64 = vmatpush.msra.mxu0 %v34
  %65 = vmatpush.msra.mxu0 %v33
  %66 = vmatpush.msra.mxu0 %v32
  %67 = vmatpush.msra.mxu0 %v31
  %68 = vmatpush.msra.mxu0 %v30
  %69 = vmatmul.f32.gmra.mxu0 %v49
  %v70 = vpop.f32.mrf.mxu0
  %v71 = vadd.f32 0.0, %v70
  %72 = vmatmul.f32.gmra.mxu0 %v51
  %v73 = vpop.f32.mrf.mxu0
  %v74 = vadd.f32 0.0, %v73
  %75 = vdwg.mxu0
  %v76 = vsel %vm48, %v17, 0
  %v78 = vsel %vm48, %v18, 0
  %80 = vmatpush.msra.mxu0 0.0
  %81 = vmatpush.msra.mxu0 0.0
  %82 = vmatpush.msra.mxu0 0.0
  %83 = vmatpush.msra.mxu0 0.0
  %84 = vmatpush.msra.mxu0 0.0
  %85 = vmatpush.msra.mxu0 0.0
  %86 = vmatpush.msra.mxu0 0.0
  %87 = vmatpush.msra.mxu0 %v28
  %88 = vmatpush.msra.mxu0 %v27
  %89 = vmatpush.msra.mxu0 %v26
  %90 = vmatpush.msra.mxu0 %v25
  %91 = vmatpush.msra.mxu0 %v24
  %92 = vmatpush.msra.mxu0 %v23
  %93 = vmatpush.msra.mxu0 %v22
  %94 = vmatpush.msra.mxu0 %v21
  %95 = vmatpush.msra.mxu0 %v20
  %96 = vmatmul.f32.gmra.mxu0 %v76
  %v97 = vpop.f32.mrf.mxu0
  %v98 = vadd.f32 %v71, %v97
  %99 = vmatmul.f32.gmra.mxu0 %v78
  %v100 = vpop.f32.mrf.mxu0
  %v101 = vadd.f32 %v74, %v100
  %102 = vdwg.mxu0
  %s103 = scalar_lea.vmem %s1, 144
  %v104 = vld [vmem:[%s103] sm:$0xff]
  %v105 = vld [vmem:[%s103 + $0x8] sm:$0xff]
  %v106 = vld [vmem:[%s103 + $0x10] sm:$0xff]
  %v107 = vld [vmem:[%s103 + $0x18] sm:$0xff]
  %v108 = vld [vmem:[%s103 + $0x20] sm:$0xff]
  %v109 = vld [vmem:[%s103 + $0x28] sm:$0xff]
  %v110 = vld [vmem:[%s103 + $0x30] sm:$0xff]
  %v111 = vld [vmem:[%s103 + $0x38] sm:$0xff]
  %v112 = vld [vmem:[%s103 + $0x40] sm:$0xff]
  %vm113 = vcmask 1045504
  %v114 = vrot.slane %v17, 2
  %v115 = vrot.slane %v18, 2
  %v116 = vsel %vm113, %v114, %v115
  %v117 = vrot.slane %v19, 2
  %v118 = vsel %vm113, %v115, %v117
  %v119 = vsel %vm48, %v116, 0
  %v121 = vsel %vm48, %v118, 0
  %123 = vmatpush.msra.mxu0 0.0
  %124 = vmatpush.msra.mxu0 0.0
  %125 = vmatpush.msra.mxu0 0.0
  %126 = vmatpush.msra.mxu0 0.0
  %127 = vmatpush.msra.mxu0 0.0
  %128 = vmatpush.msra.mxu0 0.0
  %129 = vmatpush.msra.mxu0 0.0
  %130 = vmatpush.msra.mxu0 %v112
  %131 = vmatpush.msra.mxu0 %v111
  %132 = vmatpush.msra.mxu0 %v110
  %133 = vmatpush.msra.mxu0 %v109
  %134 = vmatpush.msra.mxu0 %v108
  %135 = vmatpush.msra.mxu0 %v107
  %136 = vmatpush.msra.mxu0 %v106
  %137 = vmatpush.msra.mxu0 %v105
  %138 = vmatpush.msra.mxu0 %v104
  %139 = vmatmul.f32.gmra.mxu0 %v119
  %v140 = vpop.f32.mrf.mxu0
  %v141 = vadd.f32 0.0, %v140
  %142 = vmatmul.f32.gmra.mxu0 %v121
  %v143 = vpop.f32.mrf.mxu0
  %v144 = vadd.f32 0.0, %v143
  %145 = vdwg.mxu0
  %v146 = vadd.f32 %v98, %v141
  %v147 = vadd.f32 %v101, %v144
  %v149 = vperm.slane %v16, 0
  %v151 = vadd.f32 %v146, %v149
  %v152 = vadd.f32 %v147, %v149
  %153 = vst [vmem:[%s3] sm:$0xff] %v151
  %154 = vst [vmem:[%s3 + $0x8] sm:$0xff] %v152
  %v155 = vadd.f32 %v151, %v152
  %v156 = vrot.slane %v155, 4
  %v157 = vadd.f32 %v155, %v156
  %v158 = vrot.slane %v157, 2
  %v159 = vadd.f32 %v157, %v158
  %v160 = vrot.slane %v159, 1
  %v161 = vadd.f32 %v159, %v160
  %v162 = vmul.f32 %v151, %v151
  %v163 = vmul.f32 %v152, %v152
  %v164 = vadd.f32 %v162, %v163
  %v165 = vrot.slane %v164, 4
  %v166 = vadd.f32 %v164, %v165
  %v167 = vrot.slane %v166, 2
  %v168 = vadd.f32 %v166, %v167
  %v169 = vrot.slane %v168, 1
  %v170 = vadd.f32 %v168, %v169
  %vm171 = vcmask 1040384
  %v172 = vsel %vm171, %v161, %v170
  %173 = vst [vmem:[%s4] sm:$0x3] %v172
  %s174 = scalar_lea.vmem %s0, 24
  %v175 = vld [vmem:[%s174] sm:$0xff]
  %v176 = vld [vmem:[%s174 + $0x8] sm:$0xff]
  %v177 = vld [vmem:[%s174 + $0x10] sm:$0x3]
  %v178 = vld [vmem:[%s1] sm:$0xff]
  %v179 = vld [vmem:[%s1 + $0x8] sm:$0xff]
  %v180 = vld [vmem:[%s1 + $0x10] sm:$0xff]
  %v181 = vld [vmem:[%s1 + $0x18] sm:$0xff]
  %v182 = vld [vmem:[%s1 + $0x20] sm:$0xff]
  %v183 = vld [vmem:[%s1 + $0x28] sm:$0xff]
  %v184 = vld [vmem:[%s1 + $0x30] sm:$0xff]
  %v185 = vld [vmem:[%s1 + $0x38] sm:$0xff]
  %v186 = vld [vmem:[%s1 + $0x40] sm:$0xff]
  %v187 = vld [vmem:[%s29] sm:$0xff]
  %v188 = vld [vmem:[%s29 + $0x8] sm:$0xff]
  %v189 = vld [vmem:[%s29 + $0x10] sm:$0xff]
  %v190 = vld [vmem:[%s29 + $0x18] sm:$0xff]
  %v191 = vld [vmem:[%s29 + $0x20] sm:$0xff]
  %v192 = vld [vmem:[%s29 + $0x28] sm:$0xff]
  %v193 = vld [vmem:[%s29 + $0x30] sm:$0xff]
  %v194 = vld [vmem:[%s29 + $0x38] sm:$0xff]
  %v195 = vld [vmem:[%s29 + $0x40] sm:$0xff]
  %v199 = vrot.slane %v175, 1
  %v200 = vrot.slane %v176, 1
  %v201 = vsel %vm42, %v199, %v200
  %v202 = vrot.slane %v177, 1
  %v203 = vsel %vm42, %v200, %v202
  %v204 = vsel %vm48, %v201, 0
  %v206 = vsel %vm48, %v203, 0
  %208 = vmatpush.msra.mxu0 0.0
  %209 = vmatpush.msra.mxu0 0.0
  %210 = vmatpush.msra.mxu0 0.0
  %211 = vmatpush.msra.mxu0 0.0
  %212 = vmatpush.msra.mxu0 0.0
  %213 = vmatpush.msra.mxu0 0.0
  %214 = vmatpush.msra.mxu0 0.0
  %215 = vmatpush.msra.mxu0 %v195
  %216 = vmatpush.msra.mxu0 %v194
  %217 = vmatpush.msra.mxu0 %v193
  %218 = vmatpush.msra.mxu0 %v192
  %219 = vmatpush.msra.mxu0 %v191
  %220 = vmatpush.msra.mxu0 %v190
  %221 = vmatpush.msra.mxu0 %v189
  %222 = vmatpush.msra.mxu0 %v188
  %223 = vmatpush.msra.mxu0 %v187
  %224 = vmatmul.f32.gmra.mxu0 %v204
  %v225 = vpop.f32.mrf.mxu0
  %v226 = vadd.f32 0.0, %v225
  %227 = vmatmul.f32.gmra.mxu0 %v206
  %v228 = vpop.f32.mrf.mxu0
  %v229 = vadd.f32 0.0, %v228
  %230 = vdwg.mxu0
  %v231 = vsel %vm48, %v175, 0
  %v233 = vsel %vm48, %v176, 0
  %235 = vmatpush.msra.mxu0 0.0
  %236 = vmatpush.msra.mxu0 0.0
  %237 = vmatpush.msra.mxu0 0.0
  %238 = vmatpush.msra.mxu0 0.0
  %239 = vmatpush.msra.mxu0 0.0
  %240 = vmatpush.msra.mxu0 0.0
  %241 = vmatpush.msra.mxu0 0.0
  %242 = vmatpush.msra.mxu0 %v186
  %243 = vmatpush.msra.mxu0 %v185
  %244 = vmatpush.msra.mxu0 %v184
  %245 = vmatpush.msra.mxu0 %v183
  %246 = vmatpush.msra.mxu0 %v182
  %247 = vmatpush.msra.mxu0 %v181
  %248 = vmatpush.msra.mxu0 %v180
  %249 = vmatpush.msra.mxu0 %v179
  %250 = vmatpush.msra.mxu0 %v178
  %251 = vmatmul.f32.gmra.mxu0 %v231
  %v252 = vpop.f32.mrf.mxu0
  %v253 = vadd.f32 %v226, %v252
  %254 = vmatmul.f32.gmra.mxu0 %v233
  %v255 = vpop.f32.mrf.mxu0
  %v256 = vadd.f32 %v229, %v255
  %257 = vdwg.mxu0
  %v258 = vld [vmem:[%s103] sm:$0xff]
  %v259 = vld [vmem:[%s103 + $0x8] sm:$0xff]
  %v260 = vld [vmem:[%s103 + $0x10] sm:$0xff]
  %v261 = vld [vmem:[%s103 + $0x18] sm:$0xff]
  %v262 = vld [vmem:[%s103 + $0x20] sm:$0xff]
  %v263 = vld [vmem:[%s103 + $0x28] sm:$0xff]
  %v264 = vld [vmem:[%s103 + $0x30] sm:$0xff]
  %v265 = vld [vmem:[%s103 + $0x38] sm:$0xff]
  %v266 = vld [vmem:[%s103 + $0x40] sm:$0xff]
  %v267 = vrot.slane %v175, 2
  %v268 = vrot.slane %v176, 2
  %v269 = vsel %vm113, %v267, %v268
  %v270 = vrot.slane %v177, 2
  %v271 = vsel %vm113, %v268, %v270
  %v272 = vsel %vm48, %v269, 0
  %v274 = vsel %vm48, %v271, 0
  %276 = vmatpush.msra.mxu0 0.0
  %277 = vmatpush.msra.mxu0 0.0
  %278 = vmatpush.msra.mxu0 0.0
  %279 = vmatpush.msra.mxu0 0.0
  %280 = vmatpush.msra.mxu0 0.0
  %281 = vmatpush.msra.mxu0 0.0
  %282 = vmatpush.msra.mxu0 0.0
  %283 = vmatpush.msra.mxu0 %v266
  %284 = vmatpush.msra.mxu0 %v265
  %285 = vmatpush.msra.mxu0 %v264
  %286 = vmatpush.msra.mxu0 %v263
  %287 = vmatpush.msra.mxu0 %v262
  %288 = vmatpush.msra.mxu0 %v261
  %289 = vmatpush.msra.mxu0 %v260
  %290 = vmatpush.msra.mxu0 %v259
  %291 = vmatpush.msra.mxu0 %v258
  %292 = vmatmul.f32.gmra.mxu0 %v272
  %v293 = vpop.f32.mrf.mxu0
  %v294 = vadd.f32 0.0, %v293
  %295 = vmatmul.f32.gmra.mxu0 %v274
  %v296 = vpop.f32.mrf.mxu0
  %v297 = vadd.f32 0.0, %v296
  %298 = vdwg.mxu0
  %v299 = vadd.f32 %v253, %v294
  %v300 = vadd.f32 %v256, %v297
  %v301 = vadd.f32 %v299, %v149
  %v302 = vadd.f32 %v300, %v149
  %s303 = scalar_lea.vmem %s3, 16
  %304 = vst [vmem:[%s303] sm:$0xff] %v301
  %305 = vst [vmem:[%s303 + $0x8] sm:$0xff] %v302
  %v306 = vadd.f32 %v301, %v302
  %v307 = vrot.slane %v306, 4
  %v308 = vadd.f32 %v306, %v307
  %v309 = vrot.slane %v308, 2
  %v310 = vadd.f32 %v308, %v309
  %v311 = vrot.slane %v310, 1
  %v312 = vadd.f32 %v310, %v311
  %v313 = vmul.f32 %v301, %v301
  %v314 = vmul.f32 %v302, %v302
  %v315 = vadd.f32 %v313, %v314
  %v316 = vrot.slane %v315, 4
  %v317 = vadd.f32 %v315, %v316
  %v318 = vrot.slane %v317, 2
  %v319 = vadd.f32 %v317, %v318
  %v320 = vrot.slane %v319, 1
  %v321 = vadd.f32 %v319, %v320
  %v322 = vsel %vm171, %v312, %v321
  %s323 = scalar_lea.vmem %s4, 2
  %324 = vst [vmem:[%s323] sm:$0x3] %v322
  // Predicated region
  $region14: #{conv2d_batchnorm_relu.2} parent=0 // pred_check
    _
  $region15: #{conv2d_batchnorm_relu.2} parent=0 // pred_check_branch
    %326 = sbr.rel (0) target = $region17
  $region16: #{conv2d_batchnorm_relu.2} parent=0 // pred_region
    _
  $region17: #{conv2d_batchnorm_relu.2} parent=0 // pred_fallthru
    _
  // Predicated region
  $region18: #{conv2d_batchnorm_relu.2} parent=0 // pred_check
    _
  $region19: #{conv2d_batchnorm_relu.2} parent=0 // pred_check_branch
    %328 = sbr.rel (0) target = $region21
  $region20: #{conv2d_batchnorm_relu.2} parent=0 // pred_region
    _
  $region21: #{conv2d_batchnorm_relu.2} parent=0 // pred_fallthru
    _
  // Predicated region
  $region22: #{conv2d_batchnorm_relu.2} parent=0 // pred_check
    _
  $region23: #{conv2d_batchnorm_relu.2} parent=0 // pred_check_branch
    %330 = sbr.rel (0) target = $region25
  $region24: #{conv2d_batchnorm_relu.2} parent=0 // pred_region
    _
  $region25: #{conv2d_batchnorm_relu.2} parent=0 // pred_fallthru
    _
  // Predicated region
  $region26: #{conv2d_batchnorm_relu.2} parent=0 // pred_check
    _
  $region27: #{conv2d_batchnorm_relu.2} parent=0 // pred_check_branch
    %332 = sbr.rel (0) target = $region29
  $region28: #{conv2d_batchnorm_relu.2} parent=0 // pred_region
    _
  $region29: #{conv2d_batchnorm_relu.2} parent=0 // pred_fallthru
    _

</llo_original>
